<compile_context>
chip_gen: v7x
topology: tpu7x:2x2x1
jax: 0.10.0
libtpu: 0.0.40
codegen_flags: <defaults>
</compile_context>

<pallas_src>
import jax
import jax.numpy as jnp
from jax.experimental import pallas as pl
from jax.experimental.pallas import tpu as pltpu


def _round_up(x: int, m: int) -> int:
    return ((x + m - 1) // m) * m


def _nav_reward_kernel(goal_ref, xy_ref, out_ref):
    # goal_ref: (2,) f32 in SMEM (scalar prefetch)  -> goal position ("end")
    # xy_ref  : (2, TL) f32 in VMEM                 -> row 0 = x coords, row 1 = y coords
    # out_ref : (1, TL) f32 in VMEM                 -> lane-dense reward tile
    gx = goal_ref[0]
    gy = goal_ref[1]
    dx = xy_ref[0:1, :] - gx            # (1, TL), VPU
    dy = xy_ref[1:2, :] - gy            # (1, TL), VPU
    out_ref[...] = -jnp.sqrt(dx * dx + dy * dy)


def _nav_reward_ref(next_state, goal):
    """Plain-JAX reference / small-batch fast path."""
    diff = next_state[..., :2] - goal
    return -jnp.sqrt(jnp.sum(diff * diff, axis=-1))


def navigation_reward(state, action, next_state, goal, *,
                      tile_lanes: int = 16384,
                      pallas_min_batch: int = 1024,
                      use_pallas=None):
    """Pallas implementation of NavigationReward.forward.

    state, action are accepted for signature parity but unused (matches PyTorch).
    Returns shape next_state.shape[:-1] (the batch shape), float32.
    """
    del state, action
    ns = jnp.asarray(next_state, jnp.float32)
    goal = jnp.asarray(goal, jnp.float32).reshape(2)
    batch_shape = ns.shape[:-1]

    B = 1
    for d in batch_shape:
        B *= int(d)

    if use_pallas is None:
        use_pallas = B >= pallas_min_batch
    if not use_pallas:
        return _nav_reward_ref(ns, goal).reshape(batch_shape)

    # Only the first two features matter; lay batch out on lanes: (2, B).
    xy = ns.reshape(B, ns.shape[-1])[:, :2].T                    # (2, B)

    # Lane tile: multiple of 128, capped by tile_lanes, and sized so the grid has
    # >= 2 steps when there is enough work (v7x megacore / pipelining).
    tl = min(tile_lanes, _round_up(B, 128))
    if B >= 256:
        tl = min(tl, max(128, _round_up((B + 1) // 2, 128)))
    Bp = _round_up(B, tl)
    if Bp != B:
        xy = jnp.pad(xy, ((0, 0), (0, Bp - B)))

    out = pl.pallas_call(
        _nav_reward_kernel,
        out_shape=jax.ShapeDtypeStruct((1, Bp), jnp.float32),
        grid_spec=pltpu.PrefetchScalarGridSpec(
            num_scalar_prefetch=1,                               # goal -> SMEM scalars
            grid=(Bp // tl,),
            in_specs=[
                pl.BlockSpec((2, tl), lambda i, g: (0, i)),
            ],
            out_specs=pl.BlockSpec((1, tl), lambda i, g: (0, i)),
        ),
        compiler_params=pltpu.CompilerParams(
            dimension_semantics=("parallel",)),
    )(goal, xy)

    return out[0, :B].reshape(batch_shape)


if __name__ == "__main__":
    key = jax.random.PRNGKey(0)
    k1, k2, k3 = jax.random.split(key, 3)

    # Navigation env: state = (x, y, time), action = (dx, dy)
    B, S, A = 2048, 3, 2
    state = jax.random.normal(k1, (B, S), jnp.float32)
    action = jax.random.normal(k2, (B, A), jnp.float32)
    next_state = jax.random.normal(k3, (B, S), jnp.float32)

    # Deterministic 'end' from Navigation DEFAULT_CONFIG (goal position).
    goal = jnp.array([10.0, 10.0], jnp.float32)

    # Pallas kernel path (lane-major layout, 2 grid steps at this batch size).
    reward = navigation_reward(state, action, next_state, goal, use_pallas=True)
    reward = jax.block_until_ready(reward)

    ref = -jnp.linalg.norm(next_state[..., :2] - goal, axis=-1)
    assert reward.shape == (B,)
    assert jnp.allclose(reward, ref, atol=1e-5, rtol=1e-5)

    # Tiny-batch auto-dispatch takes the fused-XLA fast path but must match too.
    small = navigation_reward(state[:8], action[:8], next_state[:8], goal)
    small = jax.block_until_ready(small)
    assert small.shape == (8,)
    assert jnp.allclose(small, ref[:8], atol=1e-5, rtol=1e-5)

    print("KERNEL_OK")
</pallas_src>

<mosaic_0001>
module attributes {stable_mosaic.version = 11 : i64} {
  func.func @_nav_reward_kernel(%arg0: i32, %arg1: memref<2xf32, #tpu.memory_space<smem>>, %arg2: memref<2x1024xf32, #tpu.memory_space<vmem>>, %arg3: memref<1x1024xf32, #tpu.memory_space<vmem>>) attributes {dimension_semantics = [#tpu.dimension_semantics<parallel>], iteration_bounds = array<i64: 2>, scalar_prefetch = 1 : i64, scratch_operands = 0 : i64, tpu.core_type = #tpu.core_type<tc>, window_params = [{transform_indices = @transform_0, window_bounds = array<i64: 2, 1024>}, {transform_indices = @transform_1, window_bounds = array<i64: 1, 1024>}]} {
    %c0 = arith.constant 0 : index
    %0 = memref.load %arg1[%c0] : memref<2xf32, #tpu.memory_space<smem>>
    %c1 = arith.constant 1 : index
    %1 = memref.load %arg1[%c1] : memref<2xf32, #tpu.memory_space<smem>>
    %c0_0 = arith.constant 0 : index
    %c0_1 = arith.constant 0 : index
    %2 = vector.load %arg2[%c0_0, %c0_1] : memref<2x1024xf32, #tpu.memory_space<vmem>>, vector<1x1024xf32>
    %3 = vector.broadcast %0 : f32 to vector<1x1024xf32>
    %4 = arith.subf %2, %3 : vector<1x1024xf32>
    %c1_2 = arith.constant 1 : index
    %c0_3 = arith.constant 0 : index
    %5 = vector.load %arg2[%c1_2, %c0_3] : memref<2x1024xf32, #tpu.memory_space<vmem>>, vector<1x1024xf32>
    %6 = vector.broadcast %1 : f32 to vector<1x1024xf32>
    %7 = arith.subf %5, %6 : vector<1x1024xf32>
    %8 = arith.mulf %4, %4 : vector<1x1024xf32>
    %9 = arith.mulf %7, %7 : vector<1x1024xf32>
    %10 = arith.addf %8, %9 : vector<1x1024xf32>
    %11 = math.sqrt %10 : vector<1x1024xf32>
    %cst = arith.constant 0.000000e+00 : f32
    %12 = vector.broadcast %cst : f32 to vector<1x1024xf32>
    %13 = arith.subf %12, %11 : vector<1x1024xf32>
    %c0_4 = arith.constant 0 : index
    %c0_5 = arith.constant 0 : index
    %14 = vector.load %arg3[%c0_4, %c0_5] : memref<1x1024xf32, #tpu.memory_space<vmem>>, vector<1x1024xf32>
    tpu.vector_store %arg3[%c0_4, %c0_5], %13 {strides = array<i32>} : memref<1x1024xf32, #tpu.memory_space<vmem>>, vector<1x1024xf32>,
    return
  }
  func.func @transform_0(%arg0: i32, %arg1: memref<2xf32, #tpu.memory_space<smem>>) -> (i32, i32) {
    %c0_i32 = arith.constant 0 : i32
    %c0_i32_0 = arith.constant 0 : i32
    return %c0_i32, %arg0 : i32, i32
  }
  func.func @transform_1(%arg0: i32, %arg1: memref<2xf32, #tpu.memory_space<smem>>) -> (i32, i32) {
    %c0_i32 = arith.constant 0 : i32
    %c0_i32_0 = arith.constant 0 : i32
    return %c0_i32, %arg0 : i32, i32
  }
}

</mosaic_0001>

<llo_original>
// kernel: tpu_custom_call.1
$region0: #{tpu_custom_call.1}
  #allocation0 [shape = 'u32[]', space=smem, size = 0x4, offset = 0x4, fixed_abs, tag = 'smem constant byte address 0x4 - core index']
  #allocation1 [shape = 'u32[144,128]{1,0:T(1,128)}', space=vmem, size = 0x12000, scoped, tag = 'internal scratch']
  #allocation2 [shape = 's32[1]{0}', space=sflag, size = 0x4, scoped, tag = 'scoped memory for tpu_custom_call.1']
  #allocation3 [shape = 'u8[512]{0}', space=smem, size = 0x200, scoped, tag = 'prefetched SMEM operand 0']
  %s0 = inlined_call_operand.hbm [shape: f32[2], index: 0, kind: input, shape index: {}]
  %s1 = inlined_call_operand.hbm [shape: f32[2,2048], index: 1, kind: input, shape index: {}]
  %s2 = inlined_call_operand.hbm [shape: f32[1,2048], index: 2, kind: output, shape index: {}]
  %s3 = sld [smem:[#allocation0]]
  $region41: #{tpu_custom_call.1} parent=0
    _
  %s5 = ssub.s32 1, %s3
  %s6 = scalar_select 0, %s5, %s3
  %8 = dma.hbm_to_smem %s0, 16, [#allocation3], [#allocation2]
  %9 = dma.done [#allocation2], 16
  %10 = sfence
  $region1: #{tpu_custom_call.1} parent=0
    #allocation4 [shape = 'u8[16384]{0}', space=vmem, size = 0x4000, scoped, tag = 'input window, operand 1']
    #allocation5 [shape = 's32[2]{0}', space=sflag, size = 0x8, scoped, tag = 'scoped memory for tpu_custom_call.1']
    #allocation6 [shape = 's32[2]{0}', space=sflag, size = 0x8, scoped, tag = 'scoped memory for tpu_custom_call.1']
    #allocation7 [shape = 'u8[8192]{0}', space=vmem, size = 0x2000, scoped, tag = 'output window, operand 0']
    %11 = vsyncpa [#allocation5], 0
    %s12 = scalar_lea.sflag [#allocation5], 1
    %13 = vsyncpa %s12, 0
    %14 = vsyncpa [#allocation6], 0
    %s15 = scalar_lea.sflag [#allocation6], 1
    %16 = vsyncpa %s15, 0
    loop: start=0, step=1, limit=4
    $region2: #{tpu_custom_call.1} parent=1 // loop_pre_header
      _
    $region3: #{tpu_custom_call.1} parent=1 // loop_header
      %s18 = sphi 0, %s22
      %p19 = scmp.ge.s32.totalorder %s18, 4
      %s28 = sphi 0, %s30
      %s31 = sphi 0, %s28
      %s32 = sphi 0, %s31
      %s48 = sphi 0, %s32
      %s54 = sphi 0, %s56
      %s57 = sphi 0, %s54
      %s58 = sphi 0, %s57
      %s74 = sphi 0, %s58
    $region4: #{tpu_custom_call.1} parent=1 // loop_header_branch
      %21 = sbr.rel (%p19) target = $region8
    $region5: #{tpu_custom_call.1} parent=1 // loop_body
      %s23 = ssub.s32 %s18, 1
      %s24 = ssub.s32 %s18, 2
      %s25 = sadd.s32 %s18, 1
      %s26 = ssub.s32 %s18, %s25
      %p27 = scmp.eq.s32.totalorder %s26, 0
      %s29 = sadd.s32 %s28, 1
      %s30 = scalar_select %p27, %s28, %s29
      %p33 = pneg %p27
      %p34 = scmp.eq.s32.totalorder %s18, 1
      %p35 = por %p33, %p34
      %p36 = scmp.ne.s32.totalorder %s28, %s31
      %p37 = scmp.eq.s32.totalorder %s18, 0
      %p38 = por %p36, %p37
      %p39 = scmp.ne.s32.totalorder %s28, %s31
      %p40 = scmp.eq.s32.totalorder %s23, 1
      %p41 = por %p39, %p40
      %p42 = scmp.ne.s32.totalorder %s31, %s32
      %p43 = scmp.eq.s32.totalorder %s23, 0
      %p44 = por %p42, %p43
      %p45 = scmp.ne.s32.totalorder %s31, %s32
      %p46 = scmp.eq.s32.totalorder %s24, 1
      %p47 = por %p45, %p46
      %p49 = scmp.ne.s32.totalorder %s32, %s48
      %p50 = scmp.eq.s32.totalorder %s24, 0
      %p51 = por %p49, %p50
      %s52 = ssub.s32 %s18, %s25
      %p53 = scmp.eq.s32.totalorder %s52, 0
      %s55 = sadd.s32 %s54, 1
      %s56 = scalar_select %p53, %s54, %s55
      %p59 = pneg %p53
      %p60 = scmp.eq.s32.totalorder %s18, 1
      %p61 = por %p59, %p60
      %p62 = scmp.ne.s32.totalorder %s54, %s57
      %p63 = scmp.eq.s32.totalorder %s18, 0
      %p64 = por %p62, %p63
      %p65 = scmp.ne.s32.totalorder %s54, %s57
      %p66 = scmp.eq.s32.totalorder %s23, 1
      %p67 = por %p65, %p66
      %p68 = scmp.ne.s32.totalorder %s57, %s58
      %p69 = scmp.eq.s32.totalorder %s23, 0
      %p70 = por %p68, %p69
      %p71 = scmp.ne.s32.totalorder %s57, %s58
      %p72 = scmp.eq.s32.totalorder %s24, 1
      %p73 = por %p71, %p72
      %p75 = scmp.ne.s32.totalorder %s58, %s74
      %p76 = scmp.eq.s32.totalorder %s24, 0
      %p77 = por %p75, %p76
      %p78 = scmp.le.s32.totalorder 1, %s18
      %p79 = scmp.lt.s32.totalorder %s18, 3
      %p80 = pnand %p78, %p79
      %p81 = pneg %p80
      // Predicated region
      $region9: #{tpu_custom_call.1} parent=5 // pred_check
        _
      $region10: #{tpu_custom_call.1} parent=5 // pred_check_branch
        %83 = sbr.rel (%p80) target = $region12
      $region11: #{tpu_custom_call.1} parent=5 // pred_region
        %s84 = ssub.s32 %s18, 1
      $region12: #{tpu_custom_call.1} parent=5 // pred_fallthru
        _
      %p85 = scmp.lt.s32.totalorder %s18, 2
      // Predicated region
      $region13: #{tpu_custom_call.1} parent=5 // pred_check
        %p86 = pneg %p85
      $region14: #{tpu_custom_call.1} parent=5 // pred_check_branch
        %88 = sbr.rel (%p86) target = $region16
      $region15: #{tpu_custom_call.1} parent=5 // pred_region
        // Predicated region
        $region17: #{tpu_custom_call.1} parent=15 // pred_check
          %p89 = pneg %p38
        $region18: #{tpu_custom_call.1} parent=15 // pred_check_branch
          %91 = sbr.rel (%p89) target = $region20
        $region19: #{tpu_custom_call.1} parent=15 // pred_region
          %s92 = sand.u32 %s28, 1
          %s93 = scalar_lea.sflag [#allocation5], %s92
          %s94 = sand.u32 %s28, 1
          %s95 = smul.addr %s94, 16
          %s96 = scalar_lea.vmem [#allocation4], %s95
          %s97 = smul.u32 8, %s18
          %s99 = ssub.s32 256, 256
          %100 = vsyncadd %s93, %s99
          %s101 = smul.addr %s97, 32
          %s102 = scalar_lea.hbm %s1, %s101
          %s104 = sshll.u32 %s96, 4
          %s105 = int_to_ptr.vmem [resolvable:$true] %s104
          %107 = dma.hbm_to_vmem [thread:$0]  %s102, 256, %s105, %s93
        $region20: #{tpu_custom_call.1} parent=15 // pred_fallthru
          _
      $region16: #{tpu_custom_call.1} parent=5 // pred_fallthru
        _
      %p108 = scmp.le.s32.totalorder 1, %s18
      %p109 = scmp.lt.s32.totalorder %s18, 3
      %p110 = pnand %p108, %p109
      %p111 = pneg %p110
      // Predicated region
      $region21: #{tpu_custom_call.1} parent=5 // pred_check
        _
      $region22: #{tpu_custom_call.1} parent=5 // pred_check_branch
        %113 = sbr.rel (%p110) target = $region24
      $region23: #{tpu_custom_call.1} parent=5 // pred_region
        %s114 = ssub.s32 %s18, 1
        %s115 = sand.u32 %s31, 1
        %s116 = scalar_lea.sflag [#allocation5], %s115
        %s117 = sand.u32 %s31, 1
        %s118 = smul.addr %s117, 16
        %s119 = scalar_lea.vmem [#allocation4], %s118
        // Predicated region
        $region25: #{tpu_custom_call.1} parent=23 // pred_check
          %p120 = pneg %p44
        $region26: #{tpu_custom_call.1} parent=23 // pred_check_branch
          %122 = sbr.rel (%p120) target = $region28
        $region27: #{tpu_custom_call.1} parent=23 // pred_region
          %123 = dma.done %s116, 256
        $region28: #{tpu_custom_call.1} parent=23 // pred_fallthru
          _
        %s124 = sand.u32 %s31, 1
        %s125 = scalar_lea.sflag [#allocation5], %s124
        %s126 = sand.u32 %s31, 1
        %s127 = smul.addr %s126, 16
        %s128 = scalar_lea.vmem [#allocation4], %s127
        %p129 = pneg %p44
        %p130 = pneg %p41
        %p131 = pneg %p70
        %p132 = pneg %p67
        %s133 = sand.u32 %s57, 1
        %s134 = scalar_lea.sflag [#allocation6], %s133
        %s135 = sand.u32 %s57, 1
        %s136 = smul.addr %s135, 8
        %s137 = scalar_lea.vmem [#allocation7], %s136
        %s138 = smul.u32 8, %s23
        %s139 = smul.u32 8, %s23
        %s140 = sld [smem:[#allocation3]]
        %s141 = sld [smem:[#allocation3 + $0x1]]
        %v142 = vld [vmem:[%s119] ss:$2 sm:$0xff]
        %v143 = vstv %s140
        %v144 = vsub.f32 %v142, %v143
        %s145 = scalar_lea.vmem %s119, 1 [#allocation4]
        %v146 = vld [vmem:[%s145] ss:$2 sm:$0xff]
        %v147 = vstv %s141
        %v148 = vsub.f32 %v146, %v147
        %v149 = vmul.f32 %v144, %v144
        %v150 = vmul.f32 %v148, %v148
        %v151 = vadd.f32 %v149, %v150
        %v152 = vrsqrt.pop %v151
        %v153 = vmul.f32 %v151, %v152
        %vm154 = vcmp.eq.f32.partialorder %v151, inf
        %v155 = vsel %vm154, %v151, %v153
        %vm156 = vcmp.eq.f32.partialorder %v151, 0.0
        %v157 = vand.u32 %v151, 2147483648
        %v158 = vsel %vm156, %v157, %v155
        %v159 = vsub.f32 0.0, %v158
        %160 = vst [vmem:[%s137] sm:$0xff] %v159
        %s161 = sand.u32 %s57, 1
        %s162 = scalar_lea.sflag [#allocation6], %s161
        %s163 = sand.u32 %s57, 1
        %s164 = smul.addr %s163, 8
        %s165 = scalar_lea.vmem [#allocation7], %s164
        // Predicated region
        $region29: #{tpu_custom_call.1} parent=23 // pred_check
          %p166 = pneg %p67
        $region30: #{tpu_custom_call.1} parent=23 // pred_check_branch
          %168 = sbr.rel (%p166) target = $region32
        $region31: #{tpu_custom_call.1} parent=23 // pred_region
          %s169 = smul.u32 8, %s23
          %s171 = ssub.s32 128, 128
          %172 = vsyncadd %s162, %s171
          %s173 = smul.addr %s169, 16
          %s174 = scalar_lea.hbm %s2, %s173
          %s176 = sshll.u32 %s165, 4
          %s177 = int_to_ptr.vmem [resolvable:$true] %s176
          %179 = dma.vmem_to_hbm [thread:$0]  %s177, 128, %s174, %s162
        $region32: #{tpu_custom_call.1} parent=23 // pred_fallthru
          _
      $region24: #{tpu_custom_call.1} parent=5 // pred_fallthru
        _
      %p180 = scmp.le.s32.totalorder 2, %s18
      // Predicated region
      $region33: #{tpu_custom_call.1} parent=5 // pred_check
        %p181 = pneg %p180
      $region34: #{tpu_custom_call.1} parent=5 // pred_check_branch
        %183 = sbr.rel (%p181) target = $region36
      $region35: #{tpu_custom_call.1} parent=5 // pred_region
        %s184 = ssub.s32 %s18, 2
        // Predicated region
        $region37: #{tpu_custom_call.1} parent=35 // pred_check
          %p185 = pneg %p73
        $region38: #{tpu_custom_call.1} parent=35 // pred_check_branch
          %187 = sbr.rel (%p185) target = $region40
        $region39: #{tpu_custom_call.1} parent=35 // pred_region
          %s188 = sand.u32 %s58, 1
          %s189 = scalar_lea.sflag [#allocation6], %s188
          %s190 = sand.u32 %s58, 1
          %s191 = smul.addr %s190, 8
          %s192 = scalar_lea.vmem [#allocation7], %s191
          %193 = dma.done %s189, 128
        $region40: #{tpu_custom_call.1} parent=35 // pred_fallthru
          _
      $region36: #{tpu_custom_call.1} parent=5 // pred_fallthru
        _
    $region6: #{tpu_custom_call.1} parent=1 // loop_footer
      %s22 = sadd.s32 1, %s18
    $region7: #{tpu_custom_call.1} parent=1 // loop_footer_branch
      %17 = sbr.rel target = $region3
    $region8: #{tpu_custom_call.1} parent=1 // loop_exit
      _
    %194 = vsyncpa [#allocation5], 1
    %s195 = scalar_lea.sflag [#allocation5], 1
    %196 = vsyncpa %s195, 1
    %197 = vsyncpa [#allocation6], 1
    %s198 = scalar_lea.sflag [#allocation6], 1
    %199 = vsyncpa %s198, 1

</llo_original>
